<compile_context>
chip_gen: v6e
topology: v6e:2x2x1
jax: 0.10.0
libtpu: 0.0.40
codegen_flags: <defaults>
</compile_context>

<pallas_src>
import jax
import jax.numpy as jnp
from jax.experimental import pallas as pl
from jax.experimental.pallas import tpu as pltpu

_HIDDEN = 4
_LANES = 128
_SUBLANES = 8


def _round_up(n, m):
    return ((n + m - 1) // m) * m


def _cdiv(a, b):
    return (a + b - 1) // b


def _mlp_kernel(x_ref, p_ref, o_ref):
    """Fused MLP on a full-occupancy (TR, 128) slab tile.

    x_ref : (2, TR, 128) f32 in VMEM  -- x_ref[0] = feature 0, x_ref[1] = feature 1
    p_ref : (17,)        f32 in SMEM  -- [w12[0,:], w12[1,:], b12, w3, b3]
    o_ref : (TR, 128)    f32 in VMEM
    """
    x0 = x_ref[0]                                   # (TR, 128)
    x1 = x_ref[1]                                   # (TR, 128)

    # Hidden unit 0: fold the output bias into the first accumulation term.
    h = jnp.maximum(p_ref[0] * x0 + p_ref[4] * x1 + p_ref[8], 0.0)
    acc = p_ref[12] * h + p_ref[16]

    # Remaining hidden units, fully unrolled: pure VPU vector-scalar FMAs.
    for j in range(1, _HIDDEN):
        h = jnp.maximum(p_ref[j] * x0 + p_ref[4 + j] * x1 + p_ref[8 + j], 0.0)
        acc = acc + p_ref[12 + j] * h

    o_ref[...] = acc


def fold_params(params):
    """One-time parameter prep: the W2[:, :1] repair, folding of the first two
    linear layers, and packing of all 17 scalars into a flat SMEM table."""
    w1, b1 = params["w1"], params["b1"]   # (1, 2), (1,)
    w2, b2 = params["w2"], params["b2"]   # (4, 2), (4,)
    w3, b3 = params["w3"], params["b3"]   # (1, 4), (1,)

    # TODO(synk): ill-formed original forward; use only the first input column
    # of layer[0]'s weight to match the 1-feature activation.
    w2_eff = w2[:, :1]                                     # (4, 1)

    # Fold Linear(2->1) into Linear(1->4):  (x @ w1.T) @ w2_eff.T == x @ w12
    w12 = (w1.T @ w2_eff.T).astype(jnp.float32)            # (2, 4)
    b12 = (b1[0] * w2_eff[:, 0] + b2).astype(jnp.float32)  # (4,)

    flat = jnp.concatenate(
        [w12[0, :], w12[1, :], b12, w3[0, :].astype(jnp.float32),
         b3.reshape(-1).astype(jnp.float32)]
    )                                                      # (17,)

    return {
        "flat": flat,                                      # (17,)  SMEM table
        "w12": w12,                                        # (2, 4) for XLA path
        "b12": b12.reshape(1, _HIDDEN),                    # (1, 4)
        "w3": w3.astype(jnp.float32),                      # (1, 4)
        "b3": b3.reshape(1, 1).astype(jnp.float32),        # (1, 1)
    }


def model_forward(x, folded, *, max_rows_per_tile=2048, min_pallas_batch=65536):
    """x: (B, 2) float32; folded: output of fold_params().  Returns (B, 1)."""
    w12, b12, w3, b3 = folded["w12"], folded["b12"], folded["w3"], folded["b3"]
    B = int(x.shape[0])
    x = x.astype(jnp.float32)

    if B < min_pallas_batch:
        # Small/medium batch: a fully fused XLA elementwise graph beats the
        # pallas_call fixed cost + layout plumbing.
        h = jnp.maximum(x @ w12 + b12, 0.0)
        return h @ w3.T + b3

    # --- Slab layout: batch -> (R, 128) rows x lanes, R a multiple of 8. ---
    max_tr = min(max(_round_up(max_rows_per_tile, _SUBLANES), _SUBLANES), 8192)
    R = _round_up(_cdiv(B, _LANES), _SUBLANES)          # rows needed
    n_tiles = _cdiv(R, max_tr)
    if R >= 2 * _SUBLANES:
        n_tiles = max(n_tiles, 2)                       # give both v7x cores work
    TR = _round_up(_cdiv(R, n_tiles), _SUBLANES)        # rows per tile
    n_tiles = _cdiv(R, TR)
    R_pad = n_tiles * TR
    B_slab = R_pad * _LANES

    # Single pad + one transpose in; output comes back as the slab (no out
    # transpose, just flatten + slice).
    x_t = jnp.pad(x, ((0, B_slab - B), (0, 0))).T.reshape(2, R_pad, _LANES)

    tile_bytes = 3 * TR * _LANES * 4                    # in (2x) + out per step
    vmem_limit = int(min(max(4 * tile_bytes, 8 << 20), 32 << 20))

    out = pl.pallas_call(
        _mlp_kernel,
        out_shape=jax.ShapeDtypeStruct((R_pad, _LANES), jnp.float32),
        grid=(n_tiles,),
        in_specs=[
            pl.BlockSpec((2, TR, _LANES), lambda i: (0, i, 0)),        # x tiles
            pl.BlockSpec(memory_space=pltpu.MemorySpace.SMEM),         # 17 scalars
        ],
        out_specs=pl.BlockSpec((TR, _LANES), lambda i: (i, 0)),
        compiler_params=pltpu.CompilerParams(
            dimension_semantics=("parallel",),
            vmem_limit_bytes=vmem_limit,
        ),
        cost_estimate=pl.CostEstimate(
            flops=29 * R_pad * _LANES,
            transcendentals=0,
            bytes_accessed=12 * R_pad * _LANES + 4 * 17,
        ),
    )(x_t, folded["flat"])

    # Drop padded tail rows (they hold relu(b12)-derived garbage) -> (B, 1).
    return out.reshape(-1)[:B].reshape(B, 1)


def init_params(key):
    """Deterministic parameter init mirroring the nn.Linear shapes."""
    ks = jax.random.split(key, 6)

    def uniform(k, shape, fan_in):
        bound = 1.0 / jnp.sqrt(fan_in)
        return jax.random.uniform(k, shape, jnp.float32, -bound, bound)

    return {
        "w1": uniform(ks[0], (1, 2), 2.0),
        "b1": uniform(ks[1], (1,), 2.0),
        "w2": uniform(ks[2], (4, 2), 2.0),
        "b2": uniform(ks[3], (4,), 2.0),
        "w3": uniform(ks[4], (1, 4), 4.0),
        "b3": uniform(ks[5], (1,), 4.0),
    }


if __name__ == "__main__":
    key = jax.random.PRNGKey(0)
    k_x1, k_x2, k_p = jax.random.split(key, 3)

    params = init_params(k_p)
    folded = fold_params(params)        # one-time param prep

    def reference(x):
        # Pure-JAX reference of the same (repaired) computation, unfused.
        h = x @ params["w1"].T + params["b1"]
        h = h @ params["w2"][:, :1].T + params["b2"]
        h = jnp.maximum(h, 0.0)
        return h @ params["w3"].T + params["b3"]

    # 1) Original module-sized input (torch.randn(1, 2) analogue): XLA fast path.
    x_small = jax.random.normal(k_x1, (1, 2), dtype=jnp.float32)
    y_small = model_forward(x_small, folded)
    jax.block_until_ready(y_small)
    assert y_small.shape == (1, 1)
    assert jnp.allclose(y_small, reference(x_small), atol=1e-5, rtol=1e-5)

    # 2) Batched input forced through the Pallas kernel (min_pallas_batch=0).
    B = 3000
    x_large = jax.random.normal(k_x2, (B, 2), dtype=jnp.float32)
    ref_large = reference(x_large)

    # 2a) Default tile config -> 2 parallel tiles.
    y_a = model_forward(x_large, folded, min_pallas_batch=0)
    jax.block_until_ready(y_a)
    assert y_a.shape == (B, 1)
    assert jnp.allclose(y_a, ref_large, atol=1e-5, rtol=1e-5)

    # 2b) Tiny tiles -> multi-step grid with a padded tail tile.
    y_b = model_forward(x_large, folded, max_rows_per_tile=8, min_pallas_batch=0)
    jax.block_until_ready(y_b)
    assert y_b.shape == (B, 1)
    assert jnp.allclose(y_b, ref_large, atol=1e-5, rtol=1e-5)

    print("KERNEL_OK")
</pallas_src>

<mosaic_0001>
module attributes {stable_mosaic.version = 11 : i64} {
  func.func @_mlp_kernel(%arg0: i32, %arg1: memref<2x16x128xf32, #tpu.memory_space<vmem>>, %arg2: memref<17xf32, #tpu.memory_space<smem>>, %arg3: memref<16x128xf32, #tpu.memory_space<vmem>>) attributes {dimension_semantics = [#tpu.dimension_semantics<parallel>], iteration_bounds = array<i64: 2>, scalar_prefetch = 0 : i64, scratch_operands = 0 : i64, tpu.core_type = #tpu.core_type<tc>, window_params = [{transform_indices = @transform_0, window_bounds = array<i64: 2, 16, 128>}, {transform_indices = @transform_1, window_bounds = array<i64: 17>}, {transform_indices = @transform_2, window_bounds = array<i64: 16, 128>}]} {
    %c0 = arith.constant 0 : index
    %c0_0 = arith.constant 0 : index
    %c0_1 = arith.constant 0 : index
    %0 = vector.load %arg1[%c0, %c0_0, %c0_1] : memref<2x16x128xf32, #tpu.memory_space<vmem>>, vector<1x16x128xf32>
    %1 = vector.shape_cast %0 : vector<1x16x128xf32> to vector<16x128xf32>
    %c1 = arith.constant 1 : index
    %c0_2 = arith.constant 0 : index
    %c0_3 = arith.constant 0 : index
    %2 = vector.load %arg1[%c1, %c0_2, %c0_3] : memref<2x16x128xf32, #tpu.memory_space<vmem>>, vector<1x16x128xf32>
    %3 = vector.shape_cast %2 : vector<1x16x128xf32> to vector<16x128xf32>
    %c0_4 = arith.constant 0 : index
    %4 = memref.load %arg2[%c0_4] : memref<17xf32, #tpu.memory_space<smem>>
    %5 = vector.broadcast %4 : f32 to vector<16x128xf32>
    %6 = arith.mulf %5, %1 : vector<16x128xf32>
    %c4 = arith.constant 4 : index
    %7 = memref.load %arg2[%c4] : memref<17xf32, #tpu.memory_space<smem>>
    %8 = vector.broadcast %7 : f32 to vector<16x128xf32>
    %9 = arith.mulf %8, %3 : vector<16x128xf32>
    %10 = arith.addf %6, %9 : vector<16x128xf32>
    %c8 = arith.constant 8 : index
    %11 = memref.load %arg2[%c8] : memref<17xf32, #tpu.memory_space<smem>>
    %12 = vector.broadcast %11 : f32 to vector<16x128xf32>
    %13 = arith.addf %10, %12 : vector<16x128xf32>
    %cst = arith.constant 0.000000e+00 : f32
    %14 = vector.broadcast %cst : f32 to vector<16x128xf32>
    %15 = arith.maximumf %13, %14 : vector<16x128xf32>
    %c12 = arith.constant 12 : index
    %16 = memref.load %arg2[%c12] : memref<17xf32, #tpu.memory_space<smem>>
    %17 = vector.broadcast %16 : f32 to vector<16x128xf32>
    %18 = arith.mulf %17, %15 : vector<16x128xf32>
    %c16 = arith.constant 16 : index
    %19 = memref.load %arg2[%c16] : memref<17xf32, #tpu.memory_space<smem>>
    %20 = vector.broadcast %19 : f32 to vector<16x128xf32>
    %21 = arith.addf %18, %20 : vector<16x128xf32>
    %c1_5 = arith.constant 1 : index
    %22 = memref.load %arg2[%c1_5] : memref<17xf32, #tpu.memory_space<smem>>
    %23 = vector.broadcast %22 : f32 to vector<16x128xf32>
    %24 = arith.mulf %23, %1 : vector<16x128xf32>
    %c5 = arith.constant 5 : index
    %25 = memref.load %arg2[%c5] : memref<17xf32, #tpu.memory_space<smem>>
    %26 = vector.broadcast %25 : f32 to vector<16x128xf32>
    %27 = arith.mulf %26, %3 : vector<16x128xf32>
    %28 = arith.addf %24, %27 : vector<16x128xf32>
    %c9 = arith.constant 9 : index
    %29 = memref.load %arg2[%c9] : memref<17xf32, #tpu.memory_space<smem>>
    %30 = vector.broadcast %29 : f32 to vector<16x128xf32>
    %31 = arith.addf %28, %30 : vector<16x128xf32>
    %cst_6 = arith.constant 0.000000e+00 : f32
    %32 = vector.broadcast %cst_6 : f32 to vector<16x128xf32>
    %33 = arith.maximumf %31, %32 : vector<16x128xf32>
    %c13 = arith.constant 13 : index
    %34 = memref.load %arg2[%c13] : memref<17xf32, #tpu.memory_space<smem>>
    %35 = vector.broadcast %34 : f32 to vector<16x128xf32>
    %36 = arith.mulf %35, %33 : vector<16x128xf32>
    %37 = arith.addf %21, %36 : vector<16x128xf32>
    %c2 = arith.constant 2 : index
    %38 = memref.load %arg2[%c2] : memref<17xf32, #tpu.memory_space<smem>>
    %39 = vector.broadcast %38 : f32 to vector<16x128xf32>
    %40 = arith.mulf %39, %1 : vector<16x128xf32>
    %c6 = arith.constant 6 : index
    %41 = memref.load %arg2[%c6] : memref<17xf32, #tpu.memory_space<smem>>
    %42 = vector.broadcast %41 : f32 to vector<16x128xf32>
    %43 = arith.mulf %42, %3 : vector<16x128xf32>
    %44 = arith.addf %40, %43 : vector<16x128xf32>
    %c10 = arith.constant 10 : index
    %45 = memref.load %arg2[%c10] : memref<17xf32, #tpu.memory_space<smem>>
    %46 = vector.broadcast %45 : f32 to vector<16x128xf32>
    %47 = arith.addf %44, %46 : vector<16x128xf32>
    %cst_7 = arith.constant 0.000000e+00 : f32
    %48 = vector.broadcast %cst_7 : f32 to vector<16x128xf32>
    %49 = arith.maximumf %47, %48 : vector<16x128xf32>
    %c14 = arith.constant 14 : index
    %50 = memref.load %arg2[%c14] : memref<17xf32, #tpu.memory_space<smem>>
    %51 = vector.broadcast %50 : f32 to vector<16x128xf32>
    %52 = arith.mulf %51, %49 : vector<16x128xf32>
    %53 = arith.addf %37, %52 : vector<16x128xf32>
    %c3 = arith.constant 3 : index
    %54 = memref.load %arg2[%c3] : memref<17xf32, #tpu.memory_space<smem>>
    %55 = vector.broadcast %54 : f32 to vector<16x128xf32>
    %56 = arith.mulf %55, %1 : vector<16x128xf32>
    %c7 = arith.constant 7 : index
    %57 = memref.load %arg2[%c7] : memref<17xf32, #tpu.memory_space<smem>>
    %58 = vector.broadcast %57 : f32 to vector<16x128xf32>
    %59 = arith.mulf %58, %3 : vector<16x128xf32>
    %60 = arith.addf %56, %59 : vector<16x128xf32>
    %c11 = arith.constant 11 : index
    %61 = memref.load %arg2[%c11] : memref<17xf32, #tpu.memory_space<smem>>
    %62 = vector.broadcast %61 : f32 to vector<16x128xf32>
    %63 = arith.addf %60, %62 : vector<16x128xf32>
    %cst_8 = arith.constant 0.000000e+00 : f32
    %64 = vector.broadcast %cst_8 : f32 to vector<16x128xf32>
    %65 = arith.maximumf %63, %64 : vector<16x128xf32>
    %c15 = arith.constant 15 : index
    %66 = memref.load %arg2[%c15] : memref<17xf32, #tpu.memory_space<smem>>
    %67 = vector.broadcast %66 : f32 to vector<16x128xf32>
    %68 = arith.mulf %67, %65 : vector<16x128xf32>
    %69 = arith.addf %53, %68 : vector<16x128xf32>
    %c0_9 = arith.constant 0 : index
    %c0_10 = arith.constant 0 : index
    %70 = vector.load %arg3[%c0_9, %c0_10] : memref<16x128xf32, #tpu.memory_space<vmem>>, vector<16x128xf32>
    tpu.vector_store %arg3[%c0_9, %c0_10], %69 {strides = array<i32>} : memref<16x128xf32, #tpu.memory_space<vmem>>, vector<16x128xf32>,
    return
  }
  func.func @transform_0(%arg0: i32) -> (i32, i32, i32) {
    %c0_i32 = arith.constant 0 : i32
    %c0_i32_0 = arith.constant 0 : i32
    %c0_i32_1 = arith.constant 0 : i32
    return %c0_i32, %arg0, %c0_i32_0 : i32, i32, i32
  }
  func.func @transform_1(%arg0: i32) -> i32 {
    %c0_i32 = arith.constant 0 : i32
    %c0_i32_0 = arith.constant 0 : i32
    return %c0_i32 : i32
  }
  func.func @transform_2(%arg0: i32) -> (i32, i32) {
    %c0_i32 = arith.constant 0 : i32
    %c0_i32_0 = arith.constant 0 : i32
    return %arg0, %c0_i32 : i32, i32
  }
}

</mosaic_0001>

<llo_original>
// kernel: tpu_custom_call.1
$region0: #{tpu_custom_call.1}
  #allocation0 [shape = 'u32[]', space=smem, size = 0x4, offset = 0x4, fixed_abs, tag = 'smem constant byte address 0x4 - core index']
  #allocation1 [shape = 'u32[144,128]{1,0:T(1,128)}', space=vmem, size = 0x12000, scoped, tag = 'internal scratch']
  #allocation8 [shape = 's32[]', space=sflag, size = 0x4, offset = 0, fixed_abs, tag = 'sflag constant byte address 0x0 - dummy sync flag']
  %s0 = inlined_call_operand.hbm [shape: f32[2,32,128], index: 0, kind: input, shape index: {}]
  %s1 = inlined_call_operand.vmem [shape: f32[17], index: 1, kind: input, shape index: {}]
  %s2 = inlined_call_operand.hbm [shape: f32[32,128], index: 2, kind: output, shape index: {}]
  %s3 = sld [smem:[#allocation0]]
  $region49: #{tpu_custom_call.1} parent=0
    _
  %s5 = ssub.s32 1, %s3
  %s6 = scalar_select 0, %s5, %s3
  $region1: #{tpu_custom_call.1} parent=0
    #allocation2 [shape = 'u8[32768]{0}', space=vmem, size = 0x8000, scoped, tag = 'input window, operand 0']
    #allocation3 [shape = 's32[2]{0}', space=sflag, size = 0x8, scoped, tag = 'scoped memory for tpu_custom_call.1']
    #allocation4 [shape = 's32[2]{0}', space=sflag, size = 0x8, scoped, tag = 'scoped memory for tpu_custom_call.1']
    #allocation5 [shape = 's32[2]{0}', space=sflag, size = 0x8, scoped, tag = 'scoped memory for tpu_custom_call.1']
    #allocation6 [shape = 'u8[512]{0}', space=smem, size = 0x200, scoped, tag = 'input window, operand 1, single buffered']
    #allocation7 [shape = 'u8[16384]{0}', space=vmem, size = 0x4000, scoped, tag = 'output window, operand 0']
    %7 = vsyncpa [#allocation3], 0
    %s8 = scalar_lea.sflag [#allocation3], 1
    %9 = vsyncpa %s8, 0
    %10 = vsyncpa [#allocation5], 0
    %11 = vsyncpa [#allocation4], 0
    %s12 = scalar_lea.sflag [#allocation4], 1
    %13 = vsyncpa %s12, 0
    loop: start=0, step=1, limit=4
    $region2: #{tpu_custom_call.1} parent=1 // loop_pre_header
      _
    $region3: #{tpu_custom_call.1} parent=1 // loop_header
      %s15 = sphi 0, %s19
      %p16 = scmp.ge.s32.totalorder %s15, 4
      %s25 = sphi 0, %s27
      %s28 = sphi 0, %s25
      %s29 = sphi 0, %s28
      %s45 = sphi 0, %s29
      %s49 = sphi 0, %s49
      %s51 = sphi 0, %s49
      %s52 = sphi 0, %s51
      %s66 = sphi 0, %s52
      %s72 = sphi 0, %s74
      %s75 = sphi 0, %s72
      %s76 = sphi 0, %s75
      %s92 = sphi 0, %s76
    $region4: #{tpu_custom_call.1} parent=1 // loop_header_branch
      %18 = sbr.rel (%p16) target = $region8
    $region5: #{tpu_custom_call.1} parent=1 // loop_body
      %s20 = ssub.s32 %s15, 1
      %s21 = ssub.s32 %s15, 2
      %s22 = sadd.s32 %s15, 1
      %s23 = ssub.s32 %s15, %s22
      %p24 = scmp.eq.s32.totalorder %s23, 0
      %s26 = sadd.s32 %s25, 1
      %s27 = scalar_select %p24, %s25, %s26
      %p30 = pneg %p24
      %p31 = scmp.eq.s32.totalorder %s15, 1
      %p32 = por %p30, %p31
      %p33 = scmp.ne.s32.totalorder %s25, %s28
      %p34 = scmp.eq.s32.totalorder %s15, 0
      %p35 = por %p33, %p34
      %p36 = scmp.ne.s32.totalorder %s25, %s28
      %p37 = scmp.eq.s32.totalorder %s20, 1
      %p38 = por %p36, %p37
      %p39 = scmp.ne.s32.totalorder %s28, %s29
      %p40 = scmp.eq.s32.totalorder %s20, 0
      %p41 = por %p39, %p40
      %p42 = scmp.ne.s32.totalorder %s28, %s29
      %p43 = scmp.eq.s32.totalorder %s21, 1
      %p44 = por %p42, %p43
      %p46 = scmp.ne.s32.totalorder %s29, %s45
      %p47 = scmp.eq.s32.totalorder %s21, 0
      %p48 = por %p46, %p47
      %s50 = sadd.s32 %s49, 1
      %p53 = scmp.eq.s32.totalorder %s15, 1
      %p54 = scmp.ne.s32.totalorder %s49, %s51
      %p55 = scmp.eq.s32.totalorder %s15, 0
      %p56 = por %p54, %p55
      %p57 = scmp.ne.s32.totalorder %s49, %s51
      %p58 = scmp.eq.s32.totalorder %s20, 1
      %p59 = por %p57, %p58
      %p60 = scmp.ne.s32.totalorder %s51, %s52
      %p61 = scmp.eq.s32.totalorder %s20, 0
      %p62 = por %p60, %p61
      %p63 = scmp.ne.s32.totalorder %s51, %s52
      %p64 = scmp.eq.s32.totalorder %s21, 1
      %p65 = por %p63, %p64
      %p67 = scmp.ne.s32.totalorder %s52, %s66
      %p68 = scmp.eq.s32.totalorder %s21, 0
      %p69 = por %p67, %p68
      %s70 = ssub.s32 %s15, %s22
      %p71 = scmp.eq.s32.totalorder %s70, 0
      %s73 = sadd.s32 %s72, 1
      %s74 = scalar_select %p71, %s72, %s73
      %p77 = pneg %p71
      %p78 = scmp.eq.s32.totalorder %s15, 1
      %p79 = por %p77, %p78
      %p80 = scmp.ne.s32.totalorder %s72, %s75
      %p81 = scmp.eq.s32.totalorder %s15, 0
      %p82 = por %p80, %p81
      %p83 = scmp.ne.s32.totalorder %s72, %s75
      %p84 = scmp.eq.s32.totalorder %s20, 1
      %p85 = por %p83, %p84
      %p86 = scmp.ne.s32.totalorder %s75, %s76
      %p87 = scmp.eq.s32.totalorder %s20, 0
      %p88 = por %p86, %p87
      %p89 = scmp.ne.s32.totalorder %s75, %s76
      %p90 = scmp.eq.s32.totalorder %s21, 1
      %p91 = por %p89, %p90
      %p93 = scmp.ne.s32.totalorder %s76, %s92
      %p94 = scmp.eq.s32.totalorder %s21, 0
      %p95 = por %p93, %p94
      %p96 = scmp.le.s32.totalorder 1, %s15
      %p97 = scmp.lt.s32.totalorder %s15, 3
      %p98 = pnand %p96, %p97
      %p99 = pneg %p98
      // Predicated region
      $region9: #{tpu_custom_call.1} parent=5 // pred_check
        _
      $region10: #{tpu_custom_call.1} parent=5 // pred_check_branch
        %101 = sbr.rel (%p98) target = $region12
      $region11: #{tpu_custom_call.1} parent=5 // pred_region
        %s102 = ssub.s32 %s15, 1
        // Predicated region
        $region13: #{tpu_custom_call.1} parent=11 // pred_check
          %p103 = pneg %p62
        $region14: #{tpu_custom_call.1} parent=11 // pred_check_branch
          %105 = sbr.rel (%p103) target = $region16
        $region15: #{tpu_custom_call.1} parent=11 // pred_region
          %s107 = ssub.s32 16, 16
          %108 = vsyncadd [#allocation5], %s107
          %s110 = sshll.u32 %s1, 4
          %s111 = int_to_ptr.vmem [resolvable:$true] %s110
          %113 = dma.vmem_to_smem %s111, 16, [#allocation6], [#allocation5]
        $region16: #{tpu_custom_call.1} parent=11 // pred_fallthru
          _
      $region12: #{tpu_custom_call.1} parent=5 // pred_fallthru
        _
      %p114 = scmp.lt.s32.totalorder %s15, 2
      // Predicated region
      $region17: #{tpu_custom_call.1} parent=5 // pred_check
        %p115 = pneg %p114
      $region18: #{tpu_custom_call.1} parent=5 // pred_check_branch
        %117 = sbr.rel (%p115) target = $region20
      $region19: #{tpu_custom_call.1} parent=5 // pred_region
        // Predicated region
        $region21: #{tpu_custom_call.1} parent=19 // pred_check
          %p118 = pneg %p35
        $region22: #{tpu_custom_call.1} parent=19 // pred_check_branch
          %120 = sbr.rel (%p118) target = $region24
        $region23: #{tpu_custom_call.1} parent=19 // pred_region
          #allocation9 [shape = 'u32[6]{0}', space=smem, size = 0x18, scoped, tag = 'DMA stride descriptor']
          %s121 = sand.u32 %s25, 1
          %s122 = scalar_lea.sflag [#allocation3], %s121
          %s123 = sand.u32 %s25, 1
          %s124 = smul.addr %s123, 32
          %s125 = scalar_lea.vmem [#allocation2], %s124
          %s126 = smul.u32 2, %s15
          %s128 = ssub.s32 512, 512
          %129 = vsyncadd %s122, %s128
          %s130 = smul.addr %s126, 128
          %s131 = scalar_lea.hbm %s0, %s130
          %s133 = sshll.u32 1, 14
          %s134 = sxor.u32 4294967295, %s133
          %s136 = sld [smem:[#allocation0]]
          %s137 = sadd.s32 2, %s136
          %s139 = sshll.u32 7, 26
          %s140 = sxor.u32 4294967295, %s139
          %s141 = sand.u32 0, %s140
          %s142 = sshll.u32 %s137, 26
          %s143 = sor.u32 %s141, %s142
          %s144 = sshll.u32 %s125, 4
          %s145 = int_to_ptr.vmem [resolvable:$true] %s144
          %151 = sst [smem:[#allocation9]] 512
          %s152 = scalar_lea.smem [#allocation9], 1
          %153 = sst [smem:[%s152]] 256
          %s154 = scalar_lea.smem [#allocation9], 2
          %155 = sst [smem:[%s154]] 2
          %s156 = scalar_lea.smem [#allocation9], 3
          %157 = sst [smem:[%s156]] 128
          %s158 = scalar_lea.smem [#allocation9], 4
          %159 = sst [smem:[%s158]] 128
          %s160 = scalar_lea.smem [#allocation9], 5
          %161 = sst [smem:[%s160]] 8
          %163 = dma.general %s131, 512, %s145, %s122, 131072, [#allocation9], %s143, 0
        $region24: #{tpu_custom_call.1} parent=19 // pred_fallthru
          _
      $region20: #{tpu_custom_call.1} parent=5 // pred_fallthru
        _
      %p164 = scmp.le.s32.totalorder 1, %s15
      %p165 = scmp.lt.s32.totalorder %s15, 3
      %p166 = pnand %p164, %p165
      %p167 = pneg %p166
      // Predicated region
      $region25: #{tpu_custom_call.1} parent=5 // pred_check
        _
      $region26: #{tpu_custom_call.1} parent=5 // pred_check_branch
        %169 = sbr.rel (%p166) target = $region28
      $region27: #{tpu_custom_call.1} parent=5 // pred_region
        %s170 = ssub.s32 %s15, 1
        %s171 = sand.u32 %s28, 1
        %s172 = scalar_lea.sflag [#allocation3], %s171
        %s173 = sand.u32 %s28, 1
        %s174 = smul.addr %s173, 32
        %s175 = scalar_lea.vmem [#allocation2], %s174
        // Predicated region
        $region29: #{tpu_custom_call.1} parent=27 // pred_check
          %p176 = pneg %p41
        $region30: #{tpu_custom_call.1} parent=27 // pred_check_branch
          %178 = sbr.rel (%p176) target = $region32
        $region31: #{tpu_custom_call.1} parent=27 // pred_region
          %179 = dma.done %s172, 512
        $region32: #{tpu_custom_call.1} parent=27 // pred_fallthru
          _
        // Predicated region
        $region33: #{tpu_custom_call.1} parent=27 // pred_check
          %p180 = pneg %p62
        $region34: #{tpu_custom_call.1} parent=27 // pred_check_branch
          %182 = sbr.rel (%p180) target = $region36
        $region35: #{tpu_custom_call.1} parent=27 // pred_region
          %183 = dma.done [#allocation5], 16
        $region36: #{tpu_custom_call.1} parent=27 // pred_fallthru
          _
        %184 = sfence
        %s185 = sand.u32 %s28, 1
        %s186 = scalar_lea.sflag [#allocation3], %s185
        %s187 = sand.u32 %s28, 1
        %s188 = smul.addr %s187, 32
        %s189 = scalar_lea.vmem [#allocation2], %s188
        %p190 = pneg %p41
        %p191 = pneg %p38
        %p192 = pneg %p62
        %p193 = pneg %p59
        %p194 = pneg %p88
        %p195 = pneg %p85
        %s196 = sand.u32 %s75, 1
        %s197 = scalar_lea.sflag [#allocation4], %s196
        %s198 = sand.u32 %s75, 1
        %s199 = smul.addr %s198, 16
        %s200 = scalar_lea.vmem [#allocation7], %s199
        %s201 = smul.u32 2, %s20
        %s202 = smul.u32 2, %s20
        %v203 = vld [vmem:[%s175] sm:$0xff]
        %v204 = vld [vmem:[%s175 + $0x8] sm:$0xff]
        %s205 = scalar_lea.vmem %s175, 16 [#allocation2]
        %v206 = vld [vmem:[%s205] sm:$0xff]
        %v207 = vld [vmem:[%s205 + $0x8] sm:$0xff]
        %s208 = sld [smem:[#allocation6]]
        %v209 = vstv %s208
        %v210 = vmul.f32 %v209, %v203
        %v211 = vmul.f32 %v209, %v204
        %s212 = sld [smem:[#allocation6 + $0x4]]
        %v213 = vstv %s212
        %v214 = vmul.f32 %v213, %v206
        %v215 = vmul.f32 %v213, %v207
        %v216 = vadd.f32 %v210, %v214
        %v217 = vadd.f32 %v211, %v215
        %s218 = sld [smem:[#allocation6 + $0x8]]
        %v219 = vstv %s218
        %v220 = vadd.f32 %v216, %v219
        %v221 = vadd.f32 %v217, %v219
        %v222 = vmax.f32 %v220, 0.0
        %v223 = vmax.f32 %v221, 0.0
        %s224 = sld [smem:[#allocation6 + $0xc]]
        %v225 = vstv %s224
        %v226 = vmul.f32 %v225, %v222
        %v227 = vmul.f32 %v225, %v223
        %s228 = sld [smem:[#allocation6 + $0x10]]
        %v229 = vstv %s228
        %v230 = vadd.f32 %v226, %v229
        %v231 = vadd.f32 %v227, %v229
        %s232 = sld [smem:[#allocation6 + $0x1]]
        %v233 = vstv %s232
        %v234 = vmul.f32 %v233, %v203
        %v235 = vmul.f32 %v233, %v204
        %s236 = sld [smem:[#allocation6 + $0x5]]
        %v237 = vstv %s236
        %v238 = vmul.f32 %v237, %v206
        %v239 = vmul.f32 %v237, %v207
        %v240 = vadd.f32 %v234, %v238
        %v241 = vadd.f32 %v235, %v239
        %s242 = sld [smem:[#allocation6 + $0x9]]
        %v243 = vstv %s242
        %v244 = vadd.f32 %v240, %v243
        %v245 = vadd.f32 %v241, %v243
        %v246 = vmax.f32 %v244, 0.0
        %v247 = vmax.f32 %v245, 0.0
        %s248 = sld [smem:[#allocation6 + $0xd]]
        %v249 = vstv %s248
        %v250 = vmul.f32 %v249, %v246
        %v251 = vmul.f32 %v249, %v247
        %v252 = vadd.f32 %v230, %v250
        %v253 = vadd.f32 %v231, %v251
        %s254 = sld [smem:[#allocation6 + $0x2]]
        %v255 = vstv %s254
        %v256 = vmul.f32 %v255, %v203
        %v257 = vmul.f32 %v255, %v204
        %s258 = sld [smem:[#allocation6 + $0x6]]
        %v259 = vstv %s258
        %v260 = vmul.f32 %v259, %v206
        %v261 = vmul.f32 %v259, %v207
        %v262 = vadd.f32 %v256, %v260
        %v263 = vadd.f32 %v257, %v261
        %s264 = sld [smem:[#allocation6 + $0xa]]
        %v265 = vstv %s264
        %v266 = vadd.f32 %v262, %v265
        %v267 = vadd.f32 %v263, %v265
        %v268 = vmax.f32 %v266, 0.0
        %v269 = vmax.f32 %v267, 0.0
        %s270 = sld [smem:[#allocation6 + $0xe]]
        %v271 = vstv %s270
        %v272 = vmul.f32 %v271, %v268
        %v273 = vmul.f32 %v271, %v269
        %v274 = vadd.f32 %v252, %v272
        %v275 = vadd.f32 %v253, %v273
        %s276 = sld [smem:[#allocation6 + $0x3]]
        %v277 = vstv %s276
        %v278 = vmul.f32 %v277, %v203
        %v279 = vmul.f32 %v277, %v204
        %s280 = sld [smem:[#allocation6 + $0x7]]
        %v281 = vstv %s280
        %v282 = vmul.f32 %v281, %v206
        %v283 = vmul.f32 %v281, %v207
        %v284 = vadd.f32 %v278, %v282
        %v285 = vadd.f32 %v279, %v283
        %s286 = sld [smem:[#allocation6 + $0xb]]
        %v287 = vstv %s286
        %v288 = vadd.f32 %v284, %v287
        %v289 = vadd.f32 %v285, %v287
        %v290 = vmax.f32 %v288, 0.0
        %v291 = vmax.f32 %v289, 0.0
        %s292 = sld [smem:[#allocation6 + $0xf]]
        %v293 = vstv %s292
        %v294 = vmul.f32 %v293, %v290
        %v295 = vmul.f32 %v293, %v291
        %v296 = vadd.f32 %v274, %v294
        %v297 = vadd.f32 %v275, %v295
        %298 = vst [vmem:[%s200] sm:$0xff] %v296
        %299 = vst [vmem:[%s200 + $0x8] sm:$0xff] %v297
        %s300 = sand.u32 %s75, 1
        %s301 = scalar_lea.sflag [#allocation4], %s300
        %s302 = sand.u32 %s75, 1
        %s303 = smul.addr %s302, 16
        %s304 = scalar_lea.vmem [#allocation7], %s303
        // Predicated region
        $region37: #{tpu_custom_call.1} parent=27 // pred_check
          %p305 = pneg %p85
        $region38: #{tpu_custom_call.1} parent=27 // pred_check_branch
          %307 = sbr.rel (%p305) target = $region40
        $region39: #{tpu_custom_call.1} parent=27 // pred_region
          %s308 = smul.u32 2, %s20
          %s310 = ssub.s32 256, 256
          %311 = vsyncadd %s301, %s310
          %s312 = smul.addr %s308, 128
          %s313 = scalar_lea.hbm %s2, %s312
          %s314 = sshll.u32 %s304, 4
          %s315 = int_to_ptr.vmem [resolvable:$true] %s314
          %320 = dma.vmem_to_hbm [thread:$0]  %s315, 256, %s313, %s301, 128, 128, 8
        $region40: #{tpu_custom_call.1} parent=27 // pred_fallthru
          _
      $region28: #{tpu_custom_call.1} parent=5 // pred_fallthru
        _
      %p321 = scmp.le.s32.totalorder 2, %s15
      // Predicated region
      $region41: #{tpu_custom_call.1} parent=5 // pred_check
        %p322 = pneg %p321
      $region42: #{tpu_custom_call.1} parent=5 // pred_check_branch
        %324 = sbr.rel (%p322) target = $region44
      $region43: #{tpu_custom_call.1} parent=5 // pred_region
        %s325 = ssub.s32 %s15, 2
        // Predicated region
        $region45: #{tpu_custom_call.1} parent=43 // pred_check
          %p326 = pneg %p91
        $region46: #{tpu_custom_call.1} parent=43 // pred_check_branch
          %328 = sbr.rel (%p326) target = $region48
        $region47: #{tpu_custom_call.1} parent=43 // pred_region
          %s329 = sand.u32 %s76, 1
          %s330 = scalar_lea.sflag [#allocation4], %s329
          %s331 = sand.u32 %s76, 1
          %s332 = smul.addr %s331, 16
          %s333 = scalar_lea.vmem [#allocation7], %s332
          %334 = dma.done %s330, 256
        $region48: #{tpu_custom_call.1} parent=43 // pred_fallthru
          _
      $region44: #{tpu_custom_call.1} parent=5 // pred_fallthru
        _
    $region6: #{tpu_custom_call.1} parent=1 // loop_footer
      %s19 = sadd.s32 1, %s15
    $region7: #{tpu_custom_call.1} parent=1 // loop_footer_branch
      %14 = sbr.rel target = $region3
    $region8: #{tpu_custom_call.1} parent=1 // loop_exit
      _
    %335 = vsyncpa [#allocation3], 1
    %s336 = scalar_lea.sflag [#allocation3], 1
    %337 = vsyncpa %s336, 1
    %338 = vsyncpa [#allocation4], 1
    %s339 = scalar_lea.sflag [#allocation4], 1
    %340 = vsyncpa %s339, 1
    %341 = vsyncpa [#allocation5], 1
    %s342 = scalar_lea.sflag [#allocation5], 1
    %343 = vsyncpa %s342, 1

</llo_original>
